<compile_context>
chip_gen: v6e
topology: v6e:2x2x1
jax: 0.10.0
libtpu: 0.0.40
codegen_flags: <defaults>
</compile_context>

<pallas_src>
import functools

import jax
import jax.numpy as jnp
from jax.experimental import pallas as pl
from jax.experimental.pallas import tpu as pltpu


_NUM_CORES = 2                   # "parallel" leading axis: 2 TCs on v7x, serial elsewhere
_TILE_TARGET_ELEMS = 128 * 1024  # ~512 KiB f32 per streamed tile


def _pick_bce_tile(b, n):
    """Lane tile for [B, N]: full N if small, else a multiple of 128."""
    cap = max(128, ((_TILE_TARGET_ELEMS // max(b, 1)) // 128) * 128)
    return n if n <= cap else cap


def _pick_kl_tile(bp, t, c):
    """Token tile for [Bp, T, C]: full T if small, else a multiple of 8."""
    cap = max(8, ((_TILE_TARGET_ELEMS // max(bp * c, 1)) // 8) * 8)
    return t if t <= cap else cap


def _kl_near_far_kernel(
        logits_ref, labels_ref, mean_ref, logvar_ref,       # inputs
        out_ref,                                             # (1, 8, 128) per-core stats
        acc_vol, acc_tot, acc_cor, acc_lab,                  # BCE accumulators (B, tn)
        acc_kl, acc_mu, acc_std, acc_smax,                   # KL accumulators (Bp, tt, C)
        *, n_cols, n_tok, num_vol, tn, tt,
        n_bce, n_kl, bce_per_core, kl_per_core, n_inner):
    c = pl.program_id(0)   # core split ("parallel")
    j = pl.program_id(1)   # reduction step ("arbitrary")

    @pl.when(j == 0)
    def _init():
        acc_vol[...] = jnp.zeros_like(acc_vol)
        acc_tot[...] = jnp.zeros_like(acc_tot)
        acc_cor[...] = jnp.zeros_like(acc_cor)
        acc_lab[...] = jnp.zeros_like(acc_lab)
        acc_kl[...] = jnp.zeros_like(acc_kl)
        acc_mu[...] = jnp.zeros_like(acc_mu)
        acc_std[...] = jnp.zeros_like(acc_std)
        acc_smax[...] = jnp.full_like(acc_smax, -jnp.inf)

    # ----------------- BCE-with-logits stream -----------------
    bce_idx = c * bce_per_core + j
    bce_tile = jnp.minimum(bce_idx, n_bce - 1)        # matches the index_map clamp
    bce_ok = jnp.logical_and(j < bce_per_core, bce_idx < n_bce)

    @pl.when(bce_ok)
    def _bce_update():
        x = logits_ref[...].astype(jnp.float32)       # (B, tn)
        y = labels_ref[...].astype(jnp.float32)
        col = bce_tile * tn + jax.lax.broadcasted_iota(jnp.int32, x.shape, 1)
        valid = col < n_cols                          # mask ragged last tile
        vol_mask = jnp.logical_and(valid, col < num_vol)

        # numerically stable BCE-with-logits: max(x,0) - x*y + log1p(exp(-|x|))
        bce = jnp.maximum(x, 0.0) - x * y + jnp.log1p(jnp.exp(-jnp.abs(x)))
        pred = (x >= 0.0).astype(jnp.float32)

        acc_tot[...] += jnp.where(valid, bce, 0.0)
        acc_vol[...] += jnp.where(vol_mask, bce, 0.0)
        acc_cor[...] += jnp.where(valid, (pred == y).astype(jnp.float32), 0.0)
        acc_lab[...] += jnp.where(valid, y, 0.0)

    # ----------------- diagonal-Gaussian KL stream -----------------
    kl_idx = c * kl_per_core + j
    kl_tile = jnp.minimum(kl_idx, n_kl - 1)
    kl_ok = jnp.logical_and(j < kl_per_core, kl_idx < n_kl)

    @pl.when(kl_ok)
    def _kl_update():
        mu = mean_ref[...].astype(jnp.float32)        # (Bp, tt, C)
        lv = logvar_ref[...].astype(jnp.float32)
        trow = kl_tile * tt + jax.lax.broadcasted_iota(jnp.int32, mu.shape, 1)
        kvalid = trow < n_tok                         # mask ragged last tile

        std = jnp.exp(0.5 * lv)                       # single transcendental
        var = std * std                               # VPU multiply instead of 2nd exp
        kl_elem = mu * mu + var - 1.0 - lv

        acc_kl[...] += jnp.where(kvalid, kl_elem, 0.0)
        acc_mu[...] += jnp.where(kvalid, mu, 0.0)
        acc_std[...] += jnp.where(kvalid, std, 0.0)
        acc_smax[...] = jnp.maximum(acc_smax[...], jnp.where(kvalid, std, -jnp.inf))

    # ----------------- finalize: one cross-lane reduce per core -----------------
    @pl.when(j == n_inner - 1)
    def _finalize():
        vol_sum = jnp.sum(acc_vol[...])
        tot_sum = jnp.sum(acc_tot[...])
        stats = (
            vol_sum,                  # 0: sum BCE over "vol"/far columns
            tot_sum - vol_sum,        # 1: sum BCE over "near" columns
            jnp.sum(acc_cor[...]),    # 2: # correct predictions
            jnp.sum(acc_lab[...]),    # 3: sum of labels
            jnp.sum(acc_kl[...]),     # 4: sum of (mu^2 + var - 1 - logvar)
            jnp.sum(acc_mu[...]),     # 5: sum of mu
            jnp.sum(acc_std[...]),    # 6: sum of std
            jnp.max(acc_smax[...]),   # 7: max of std (combined with max in wrapper)
        )
        row = jax.lax.broadcasted_iota(jnp.int32, (8, 128), 0)
        res = jnp.zeros((8, 128), jnp.float32)
        for k, s in enumerate(stats):
            res = jnp.where(row == k, s, res)
        out_ref[0] = res


def kl_near_far_forward(post_mean, post_logvar, logits, labels,
                        near_weight=0.1, kl_weight=1.0,
                        num_near_samples=None, split="train",
                        tile_n=None, tile_t=None):
    B, N = logits.shape
    num_vol = N // 2 if num_near_samples is None else N - num_near_samples
    num_near = N - num_vol

    has_posterior = post_mean is not None
    if not has_posterior:
        # Tiny dummy posterior stream so one fused kernel covers both code
        # paths; its (negligible, single-element) stats are discarded below.
        post_mean = jnp.zeros((1, 1, 1), jnp.float32)
        post_logvar = jnp.zeros((1, 1, 1), jnp.float32)
    Bp, T, C = post_mean.shape

    tn = _pick_bce_tile(B, N) if tile_n is None else tile_n
    tt = _pick_kl_tile(Bp, T, C) if tile_t is None else tile_t

    n_bce = pl.cdiv(N, tn)
    n_kl = pl.cdiv(T, tt)
    bce_per_core = pl.cdiv(n_bce, _NUM_CORES)
    kl_per_core = pl.cdiv(n_kl, _NUM_CORES)
    n_inner = max(bce_per_core, kl_per_core)

    def bce_map(c, j):   # clamped: repeated index => no re-DMA on idle steps
        return (0, jnp.minimum(c * bce_per_core + j, n_bce - 1))

    def kl_map(c, j):
        return (0, jnp.minimum(c * kl_per_core + j, n_kl - 1), 0)

    kernel = functools.partial(
        _kl_near_far_kernel,
        n_cols=N, n_tok=T, num_vol=num_vol, tn=tn, tt=tt,
        n_bce=n_bce, n_kl=n_kl,
        bce_per_core=bce_per_core, kl_per_core=kl_per_core, n_inner=n_inner)

    stats = pl.pallas_call(
        kernel,
        out_shape=jax.ShapeDtypeStruct((_NUM_CORES, 8, 128), jnp.float32),
        grid=(_NUM_CORES, n_inner),
        in_specs=[
            pl.BlockSpec((B, tn), bce_map),
            pl.BlockSpec((B, tn), bce_map),
            pl.BlockSpec((Bp, tt, C), kl_map),
            pl.BlockSpec((Bp, tt, C), kl_map),
        ],
        out_specs=pl.BlockSpec((1, 8, 128), lambda c, j: (c, 0, 0)),
        scratch_shapes=[
            pltpu.VMEM((B, tn), jnp.float32),       # acc_vol
            pltpu.VMEM((B, tn), jnp.float32),       # acc_tot
            pltpu.VMEM((B, tn), jnp.float32),       # acc_cor
            pltpu.VMEM((B, tn), jnp.float32),       # acc_lab
            pltpu.VMEM((Bp, tt, C), jnp.float32),   # acc_kl
            pltpu.VMEM((Bp, tt, C), jnp.float32),   # acc_mu
            pltpu.VMEM((Bp, tt, C), jnp.float32),   # acc_std
            pltpu.VMEM((Bp, tt, C), jnp.float32),   # acc_smax
        ],
        compiler_params=pltpu.CompilerParams(
            dimension_semantics=("parallel", "arbitrary")),
    )(logits, labels, post_mean, post_logvar)

    per_core = stats[:, :, 0]                 # (_NUM_CORES, 8)
    sums = jnp.sum(per_core[:, :7], axis=0)   # additive stats across cores
    vol_sum, near_sum, cor_sum, lab_sum, kl_sum, mu_sum, std_sum = (
        sums[0], sums[1], sums[2], sums[3], sums[4], sums[5], sums[6])
    std_max = jnp.max(per_core[:, 7])         # max-combined stat

    vol_bce = vol_sum / jnp.float32(B * num_vol)
    near_bce = near_sum / jnp.float32(B * num_near)
    accuracy = cor_sum / jnp.float32(B * N)
    pos_ratio = lab_sum / jnp.float32(B * N)

    kl_loss = 0.5 * kl_sum / jnp.float32(Bp) if has_posterior else jnp.float32(0.0)

    loss = vol_bce + near_bce * near_weight + kl_loss * kl_weight

    log = {
        f"{split}/total_loss": loss,
        f"{split}/near": near_bce,
        f"{split}/far": vol_bce,
        f"{split}/kl": kl_loss,
        f"{split}/accuracy": accuracy,
        f"{split}/pos_ratio": pos_ratio,
    }
    if has_posterior:
        denom = jnp.float32(Bp * T * C)
        log[f"{split}/mean"] = mu_sum / denom
        log[f"{split}/std_mean"] = std_sum / denom
        log[f"{split}/std_max"] = std_max
    return loss, log


# ---------------------------------------------------------------------------
# Pure-JAX reference (sanity check)
# ---------------------------------------------------------------------------
def _ref_forward(post_mean, post_logvar, logits, labels,
                 near_weight=0.1, kl_weight=1.0, num_near_samples=None):
    B, N = logits.shape
    num_vol = N // 2 if num_near_samples is None else N - num_near_samples
    x = logits.astype(jnp.float32)
    y = labels.astype(jnp.float32)
    bce = jnp.maximum(x, 0.0) - x * y + jnp.log1p(jnp.exp(-jnp.abs(x)))
    vol_bce = jnp.mean(bce[:, :num_vol])
    near_bce = jnp.mean(bce[:, num_vol:])
    mu = post_mean.astype(jnp.float32)
    lv = post_logvar.astype(jnp.float32)
    kl = 0.5 * jnp.sum(mu * mu + jnp.exp(lv) - 1.0 - lv, axis=(1, 2))
    kl_loss = jnp.mean(kl)
    loss = vol_bce + near_bce * near_weight + kl_loss * kl_weight
    std = jnp.exp(0.5 * lv)
    return {
        "loss": loss, "near": near_bce, "far": vol_bce, "kl": kl_loss,
        "accuracy": jnp.mean(((x >= 0.0).astype(jnp.float32) == y).astype(jnp.float32)),
        "pos_ratio": jnp.mean(y),
        "mean": jnp.mean(mu), "std_mean": jnp.mean(std), "std_max": jnp.max(std),
    }


def _check_case(key, B, N, T, C, dtype, tile_n=None, tile_t=None, split="train"):
    k1, k2, k3, k4 = jax.random.split(key, 4)
    logits = jax.random.normal(k1, (B, N)).astype(dtype)
    labels = (jax.random.uniform(k2, (B, N)) > 0.5).astype(dtype)
    post_mean = 0.1 * jax.random.normal(k3, (B, T, C), dtype=jnp.float32)
    post_logvar = 0.05 * jax.random.normal(k4, (B, T, C), dtype=jnp.float32)

    loss, log = kl_near_far_forward(post_mean, post_logvar, logits, labels,
                                    near_weight=0.1, kl_weight=1.0, split=split,
                                    tile_n=tile_n, tile_t=tile_t)
    loss = jax.block_until_ready(loss)
    ref = _ref_forward(post_mean, post_logvar, logits, labels)

    checks = {
        "loss": (loss, ref["loss"]),
        "near": (log[f"{split}/near"], ref["near"]),
        "far": (log[f"{split}/far"], ref["far"]),
        "kl": (log[f"{split}/kl"], ref["kl"]),
        "accuracy": (log[f"{split}/accuracy"], ref["accuracy"]),
        "pos_ratio": (log[f"{split}/pos_ratio"], ref["pos_ratio"]),
        "mean": (log[f"{split}/mean"], ref["mean"]),
        "std_mean": (log[f"{split}/std_mean"], ref["std_mean"]),
        "std_max": (log[f"{split}/std_max"], ref["std_max"]),
    }
    for name, (got, want) in checks.items():
        assert jnp.allclose(got, want, rtol=1e-5, atol=1e-5), (name, got, want)


if __name__ == "__main__":
    key = jax.random.PRNGKey(0)
    k_a, k_b = jax.random.split(key)

    # Case 1: small single-tile path (blocks == full arrays).
    _check_case(k_a, B=4, N=16, T=8, C=32, dtype=jnp.float32)

    # Case 2: multi-tile path with ragged tails + bf16 logits/labels;
    # exercises masking, the non-lane-aligned vol/near split and the
    # per-core partial-stat combination.
    _check_case(k_b, B=2, N=300, T=20, C=128, dtype=jnp.bfloat16,
                tile_n=128, tile_t=8)

    print("KERNEL_OK")
</pallas_src>

<mosaic_0001>
module attributes {stable_mosaic.version = 11 : i64} {
  func.func @_kl_near_far_kernel(%arg0: i32, %arg1: i32, %arg2: memref<4x16xf32, #tpu.memory_space<vmem>>, %arg3: memref<4x16xf32, #tpu.memory_space<vmem>>, %arg4: memref<4x8x32xf32, #tpu.memory_space<vmem>>, %arg5: memref<4x8x32xf32, #tpu.memory_space<vmem>>, %arg6: memref<1x8x128xf32, #tpu.memory_space<vmem>>, %arg7: memref<4x16xf32, #tpu.memory_space<vmem>>, %arg8: memref<4x16xf32, #tpu.memory_space<vmem>>, %arg9: memref<4x16xf32, #tpu.memory_space<vmem>>, %arg10: memref<4x16xf32, #tpu.memory_space<vmem>>, %arg11: memref<4x8x32xf32, #tpu.memory_space<vmem>>, %arg12: memref<4x8x32xf32, #tpu.memory_space<vmem>>, %arg13: memref<4x8x32xf32, #tpu.memory_space<vmem>>, %arg14: memref<4x8x32xf32, #tpu.memory_space<vmem>>) attributes {dimension_semantics = [#tpu.dimension_semantics<parallel>, #tpu.dimension_semantics<arbitrary>], iteration_bounds = array<i64: 2, 1>, scalar_prefetch = 0 : i64, scratch_operands = 8 : i64, tpu.core_type = #tpu.core_type<tc>, window_params = [{transform_indices = @transform_0, window_bounds = array<i64: 4, 16>}, {transform_indices = @transform_1, window_bounds = array<i64: 4, 16>}, {transform_indices = @transform_2, window_bounds = array<i64: 4, 8, 32>}, {transform_indices = @transform_3, window_bounds = array<i64: 4, 8, 32>}, {transform_indices = @transform_4, window_bounds = array<i64: 1, 8, 128>}]} {
    %c0_i32 = arith.constant 0 : i32
    %0 = arith.cmpi eq, %arg1, %c0_i32 : i32
    %1 = arith.extui %0 : i1 to i32
    %c0_i32_0 = arith.constant 0 : i32
    %2 = arith.cmpi ne, %1, %c0_i32_0 : i32
    scf.if %2 {
      %cst = arith.constant 0.000000e+00 : f32
      %22 = vector.broadcast %cst : f32 to vector<4x16xf32>
      %c0 = arith.constant 0 : index
      %c0_12 = arith.constant 0 : index
      %23 = vector.load %arg7[%c0, %c0_12] : memref<4x16xf32, #tpu.memory_space<vmem>>, vector<4x16xf32>
      tpu.vector_store %arg7[%c0, %c0_12], %22 {strides = array<i32>} : memref<4x16xf32, #tpu.memory_space<vmem>>, vector<4x16xf32>,
      %cst_13 = arith.constant 0.000000e+00 : f32
      %24 = vector.broadcast %cst_13 : f32 to vector<4x16xf32>
      %c0_14 = arith.constant 0 : index
      %c0_15 = arith.constant 0 : index
      %25 = vector.load %arg8[%c0_14, %c0_15] : memref<4x16xf32, #tpu.memory_space<vmem>>, vector<4x16xf32>
      tpu.vector_store %arg8[%c0_14, %c0_15], %24 {strides = array<i32>} : memref<4x16xf32, #tpu.memory_space<vmem>>, vector<4x16xf32>,
      %cst_16 = arith.constant 0.000000e+00 : f32
      %26 = vector.broadcast %cst_16 : f32 to vector<4x16xf32>
      %c0_17 = arith.constant 0 : index
      %c0_18 = arith.constant 0 : index
      %27 = vector.load %arg9[%c0_17, %c0_18] : memref<4x16xf32, #tpu.memory_space<vmem>>, vector<4x16xf32>
      tpu.vector_store %arg9[%c0_17, %c0_18], %26 {strides = array<i32>} : memref<4x16xf32, #tpu.memory_space<vmem>>, vector<4x16xf32>,
      %cst_19 = arith.constant 0.000000e+00 : f32
      %28 = vector.broadcast %cst_19 : f32 to vector<4x16xf32>
      %c0_20 = arith.constant 0 : index
      %c0_21 = arith.constant 0 : index
      %29 = vector.load %arg10[%c0_20, %c0_21] : memref<4x16xf32, #tpu.memory_space<vmem>>, vector<4x16xf32>
      tpu.vector_store %arg10[%c0_20, %c0_21], %28 {strides = array<i32>} : memref<4x16xf32, #tpu.memory_space<vmem>>, vector<4x16xf32>,
      %cst_22 = arith.constant 0.000000e+00 : f32
      %30 = vector.broadcast %cst_22 : f32 to vector<4x8x32xf32>
      %c0_23 = arith.constant 0 : index
      %c0_24 = arith.constant 0 : index
      %c0_25 = arith.constant 0 : index
      %31 = vector.load %arg11[%c0_23, %c0_24, %c0_25] : memref<4x8x32xf32, #tpu.memory_space<vmem>>, vector<4x8x32xf32>
      tpu.vector_store %arg11[%c0_23, %c0_24, %c0_25], %30 {strides = array<i32>} : memref<4x8x32xf32, #tpu.memory_space<vmem>>, vector<4x8x32xf32>,
      %cst_26 = arith.constant 0.000000e+00 : f32
      %32 = vector.broadcast %cst_26 : f32 to vector<4x8x32xf32>
      %c0_27 = arith.constant 0 : index
      %c0_28 = arith.constant 0 : index
      %c0_29 = arith.constant 0 : index
      %33 = vector.load %arg12[%c0_27, %c0_28, %c0_29] : memref<4x8x32xf32, #tpu.memory_space<vmem>>, vector<4x8x32xf32>
      tpu.vector_store %arg12[%c0_27, %c0_28, %c0_29], %32 {strides = array<i32>} : memref<4x8x32xf32, #tpu.memory_space<vmem>>, vector<4x8x32xf32>,
      %cst_30 = arith.constant 0.000000e+00 : f32
      %34 = vector.broadcast %cst_30 : f32 to vector<4x8x32xf32>
      %c0_31 = arith.constant 0 : index
      %c0_32 = arith.constant 0 : index
      %c0_33 = arith.constant 0 : index
      %35 = vector.load %arg13[%c0_31, %c0_32, %c0_33] : memref<4x8x32xf32, #tpu.memory_space<vmem>>, vector<4x8x32xf32>
      tpu.vector_store %arg13[%c0_31, %c0_32, %c0_33], %34 {strides = array<i32>} : memref<4x8x32xf32, #tpu.memory_space<vmem>>, vector<4x8x32xf32>,
      %cst_34 = arith.constant 0xFF800000 : f32
      %36 = vector.broadcast %cst_34 : f32 to vector<4x8x32xf32>
      %c0_35 = arith.constant 0 : index
      %c0_36 = arith.constant 0 : index
      %c0_37 = arith.constant 0 : index
      %37 = vector.load %arg14[%c0_35, %c0_36, %c0_37] : memref<4x8x32xf32, #tpu.memory_space<vmem>>, vector<4x8x32xf32>
      tpu.vector_store %arg14[%c0_35, %c0_36, %c0_37], %36 {strides = array<i32>} : memref<4x8x32xf32, #tpu.memory_space<vmem>>, vector<4x8x32xf32>,
    } else {
    }
    %c1_i32 = arith.constant 1 : i32
    %3 = arith.muli %arg0, %c1_i32 : i32
    %4 = arith.addi %3, %arg1 : i32
    %c0_i32_1 = arith.constant 0 : i32
    %5 = arith.minsi %4, %c0_i32_1 : i32
    %c1_i32_2 = arith.constant 1 : i32
    %6 = arith.cmpi slt, %arg1, %c1_i32_2 : i32
    %c1_i32_3 = arith.constant 1 : i32
    %7 = arith.cmpi slt, %4, %c1_i32_3 : i32
    %8 = arith.andi %6, %7 : i1
    %9 = arith.extui %8 : i1 to i32
    %c0_i32_4 = arith.constant 0 : i32
    %10 = arith.cmpi ne, %9, %c0_i32_4 : i32
    scf.if %10 {
      %c0 = arith.constant 0 : index
      %c0_12 = arith.constant 0 : index
      %22 = vector.load %arg2[%c0, %c0_12] : memref<4x16xf32, #tpu.memory_space<vmem>>, vector<4x16xf32>
      %c0_13 = arith.constant 0 : index
      %c0_14 = arith.constant 0 : index
      %23 = vector.load %arg3[%c0_13, %c0_14] : memref<4x16xf32, #tpu.memory_space<vmem>>, vector<4x16xf32>
      %c16_i32 = arith.constant 16 : i32
      %24 = arith.muli %5, %c16_i32 : i32
      %25 = tpu.iota {dimensions = array<i32: 1>} : vector<4x16xi32>
      %26 = vector.broadcast %24 : i32 to vector<4x16xi32>
      %27 = arith.addi %26, %25 : vector<4x16xi32>
      %c16_i32_15 = arith.constant 16 : i32
      %28 = vector.broadcast %c16_i32_15 : i32 to vector<4x16xi32>
      %29 = arith.cmpi slt, %27, %28 : vector<4x16xi32>
      %c8_i32 = arith.constant 8 : i32
      %30 = vector.broadcast %c8_i32 : i32 to vector<4x16xi32>
      %31 = arith.cmpi slt, %27, %30 : vector<4x16xi32>
      %32 = arith.andi %29, %31 : vector<4x16xi1>
      %cst = arith.constant 0.000000e+00 : f32
      %33 = vector.broadcast %cst : f32 to vector<4x16xf32>
      %34 = arith.maximumf %22, %33 : vector<4x16xf32>
      %35 = arith.mulf %22, %23 : vector<4x16xf32>
      %36 = arith.subf %34, %35 : vector<4x16xf32>
      %37 = math.absf %22 : vector<4x16xf32>
      %cst_16 = arith.constant 0.000000e+00 : f32
      %38 = vector.broadcast %cst_16 : f32 to vector<4x16xf32>
      %39 = arith.subf %38, %37 : vector<4x16xf32>
      %40 = math.exp %39 : vector<4x16xf32>
      %41 = math.log1p %40 : vector<4x16xf32>
      %42 = arith.addf %36, %41 : vector<4x16xf32>
      %cst_17 = arith.constant 0.000000e+00 : f32
      %43 = vector.broadcast %cst_17 : f32 to vector<4x16xf32>
      %44 = arith.cmpf oge, %22, %43 : vector<4x16xf32>
      %45 = arith.extui %44 : vector<4x16xi1> to vector<4x16xi32>
      %46 = arith.sitofp %45 : vector<4x16xi32> to vector<4x16xf32>
      %c0_18 = arith.constant 0 : index
      %c0_19 = arith.constant 0 : index
      %47 = vector.load %arg8[%c0_18, %c0_19] : memref<4x16xf32, #tpu.memory_space<vmem>>, vector<4x16xf32>
      %cst_20 = arith.constant 0.000000e+00 : f32
      %48 = vector.broadcast %cst_20 : f32 to vector<4x16xf32>
      %49 = arith.select %29, %42, %48 : vector<4x16xi1>, vector<4x16xf32>
      %50 = arith.addf %47, %49 : vector<4x16xf32>
      %c0_21 = arith.constant 0 : index
      %c0_22 = arith.constant 0 : index
      %51 = vector.load %arg8[%c0_21, %c0_22] : memref<4x16xf32, #tpu.memory_space<vmem>>, vector<4x16xf32>
      tpu.vector_store %arg8[%c0_21, %c0_22], %50 {strides = array<i32>} : memref<4x16xf32, #tpu.memory_space<vmem>>, vector<4x16xf32>,
      %c0_23 = arith.constant 0 : index
      %c0_24 = arith.constant 0 : index
      %52 = vector.load %arg7[%c0_23, %c0_24] : memref<4x16xf32, #tpu.memory_space<vmem>>, vector<4x16xf32>
      %cst_25 = arith.constant 0.000000e+00 : f32
      %53 = vector.broadcast %cst_25 : f32 to vector<4x16xf32>
      %54 = arith.select %32, %42, %53 : vector<4x16xi1>, vector<4x16xf32>
      %55 = arith.addf %52, %54 : vector<4x16xf32>
      %c0_26 = arith.constant 0 : index
      %c0_27 = arith.constant 0 : index
      %56 = vector.load %arg7[%c0_26, %c0_27] : memref<4x16xf32, #tpu.memory_space<vmem>>, vector<4x16xf32>
      tpu.vector_store %arg7[%c0_26, %c0_27], %55 {strides = array<i32>} : memref<4x16xf32, #tpu.memory_space<vmem>>, vector<4x16xf32>,
      %c0_28 = arith.constant 0 : index
      %c0_29 = arith.constant 0 : index
      %57 = vector.load %arg9[%c0_28, %c0_29] : memref<4x16xf32, #tpu.memory_space<vmem>>, vector<4x16xf32>
      %58 = arith.cmpf oeq, %46, %23 : vector<4x16xf32>
      %59 = arith.extui %58 : vector<4x16xi1> to vector<4x16xi32>
      %60 = arith.sitofp %59 : vector<4x16xi32> to vector<4x16xf32>
      %cst_30 = arith.constant 0.000000e+00 : f32
      %61 = vector.broadcast %cst_30 : f32 to vector<4x16xf32>
      %62 = arith.select %29, %60, %61 : vector<4x16xi1>, vector<4x16xf32>
      %63 = arith.addf %57, %62 : vector<4x16xf32>
      %c0_31 = arith.constant 0 : index
      %c0_32 = arith.constant 0 : index
      %64 = vector.load %arg9[%c0_31, %c0_32] : memref<4x16xf32, #tpu.memory_space<vmem>>, vector<4x16xf32>
      tpu.vector_store %arg9[%c0_31, %c0_32], %63 {strides = array<i32>} : memref<4x16xf32, #tpu.memory_space<vmem>>, vector<4x16xf32>,
      %c0_33 = arith.constant 0 : index
      %c0_34 = arith.constant 0 : index
      %65 = vector.load %arg10[%c0_33, %c0_34] : memref<4x16xf32, #tpu.memory_space<vmem>>, vector<4x16xf32>
      %cst_35 = arith.constant 0.000000e+00 : f32
      %66 = vector.broadcast %cst_35 : f32 to vector<4x16xf32>
      %67 = arith.select %29, %23, %66 : vector<4x16xi1>, vector<4x16xf32>
      %68 = arith.addf %65, %67 : vector<4x16xf32>
      %c0_36 = arith.constant 0 : index
      %c0_37 = arith.constant 0 : index
      %69 = vector.load %arg10[%c0_36, %c0_37] : memref<4x16xf32, #tpu.memory_space<vmem>>, vector<4x16xf32>
      tpu.vector_store %arg10[%c0_36, %c0_37], %68 {strides = array<i32>} : memref<4x16xf32, #tpu.memory_space<vmem>>, vector<4x16xf32>,
    } else {
    }
    %c1_i32_5 = arith.constant 1 : i32
    %11 = arith.muli %arg0, %c1_i32_5 : i32
    %12 = arith.addi %11, %arg1 : i32
    %c0_i32_6 = arith.constant 0 : i32
    %13 = arith.minsi %12, %c0_i32_6 : i32
    %c1_i32_7 = arith.constant 1 : i32
    %14 = arith.cmpi slt, %arg1, %c1_i32_7 : i32
    %c1_i32_8 = arith.constant 1 : i32
    %15 = arith.cmpi slt, %12, %c1_i32_8 : i32
    %16 = arith.andi %14, %15 : i1
    %17 = arith.extui %16 : i1 to i32
    %c0_i32_9 = arith.constant 0 : i32
    %18 = arith.cmpi ne, %17, %c0_i32_9 : i32
    scf.if %18 {
      %c0 = arith.constant 0 : index
      %c0_12 = arith.constant 0 : index
      %c0_13 = arith.constant 0 : index
      %22 = vector.load %arg4[%c0, %c0_12, %c0_13] : memref<4x8x32xf32, #tpu.memory_space<vmem>>, vector<4x8x32xf32>
      %c0_14 = arith.constant 0 : index
      %c0_15 = arith.constant 0 : index
      %c0_16 = arith.constant 0 : index
      %23 = vector.load %arg5[%c0_14, %c0_15, %c0_16] : memref<4x8x32xf32, #tpu.memory_space<vmem>>, vector<4x8x32xf32>
      %c8_i32 = arith.constant 8 : i32
      %24 = arith.muli %13, %c8_i32 : i32
      %25 = tpu.iota {dimensions = array<i32: 1>} : vector<4x8x32xi32>
      %26 = vector.broadcast %24 : i32 to vector<4x8x32xi32>
      %27 = arith.addi %26, %25 : vector<4x8x32xi32>
      %c8_i32_17 = arith.constant 8 : i32
      %28 = vector.broadcast %c8_i32_17 : i32 to vector<4x8x32xi32>
      %29 = arith.cmpi slt, %27, %28 : vector<4x8x32xi32>
      %cst = arith.constant 5.000000e-01 : f32
      %30 = vector.broadcast %cst : f32 to vector<4x8x32xf32>
      %31 = arith.mulf %30, %23 : vector<4x8x32xf32>
      %32 = math.exp %31 : vector<4x8x32xf32>
      %33 = arith.mulf %32, %32 : vector<4x8x32xf32>
      %34 = arith.mulf %22, %22 : vector<4x8x32xf32>
      %35 = arith.addf %34, %33 : vector<4x8x32xf32>
      %cst_18 = arith.constant 1.000000e+00 : f32
      %36 = vector.broadcast %cst_18 : f32 to vector<4x8x32xf32>
      %37 = arith.subf %35, %36 : vector<4x8x32xf32>
      %38 = arith.subf %37, %23 : vector<4x8x32xf32>
      %c0_19 = arith.constant 0 : index
      %c0_20 = arith.constant 0 : index
      %c0_21 = arith.constant 0 : index
      %39 = vector.load %arg11[%c0_19, %c0_20, %c0_21] : memref<4x8x32xf32, #tpu.memory_space<vmem>>, vector<4x8x32xf32>
      %cst_22 = arith.constant 0.000000e+00 : f32
      %40 = vector.broadcast %cst_22 : f32 to vector<4x8x32xf32>
      %41 = arith.select %29, %38, %40 : vector<4x8x32xi1>, vector<4x8x32xf32>
      %42 = arith.addf %39, %41 : vector<4x8x32xf32>
      %c0_23 = arith.constant 0 : index
      %c0_24 = arith.constant 0 : index
      %c0_25 = arith.constant 0 : index
      %43 = vector.load %arg11[%c0_23, %c0_24, %c0_25] : memref<4x8x32xf32, #tpu.memory_space<vmem>>, vector<4x8x32xf32>
      tpu.vector_store %arg11[%c0_23, %c0_24, %c0_25], %42 {strides = array<i32>} : memref<4x8x32xf32, #tpu.memory_space<vmem>>, vector<4x8x32xf32>,
      %c0_26 = arith.constant 0 : index
      %c0_27 = arith.constant 0 : index
      %c0_28 = arith.constant 0 : index
      %44 = vector.load %arg12[%c0_26, %c0_27, %c0_28] : memref<4x8x32xf32, #tpu.memory_space<vmem>>, vector<4x8x32xf32>
      %cst_29 = arith.constant 0.000000e+00 : f32
      %45 = vector.broadcast %cst_29 : f32 to vector<4x8x32xf32>
      %46 = arith.select %29, %22, %45 : vector<4x8x32xi1>, vector<4x8x32xf32>
      %47 = arith.addf %44, %46 : vector<4x8x32xf32>
      %c0_30 = arith.constant 0 : index
      %c0_31 = arith.constant 0 : index
      %c0_32 = arith.constant 0 : index
      %48 = vector.load %arg12[%c0_30, %c0_31, %c0_32] : memref<4x8x32xf32, #tpu.memory_space<vmem>>, vector<4x8x32xf32>
      tpu.vector_store %arg12[%c0_30, %c0_31, %c0_32], %47 {strides = array<i32>} : memref<4x8x32xf32, #tpu.memory_space<vmem>>, vector<4x8x32xf32>,
      %c0_33 = arith.constant 0 : index
      %c0_34 = arith.constant 0 : index
      %c0_35 = arith.constant 0 : index
      %49 = vector.load %arg13[%c0_33, %c0_34, %c0_35] : memref<4x8x32xf32, #tpu.memory_space<vmem>>, vector<4x8x32xf32>
      %cst_36 = arith.constant 0.000000e+00 : f32
      %50 = vector.broadcast %cst_36 : f32 to vector<4x8x32xf32>
      %51 = arith.select %29, %32, %50 : vector<4x8x32xi1>, vector<4x8x32xf32>
      %52 = arith.addf %49, %51 : vector<4x8x32xf32>
      %c0_37 = arith.constant 0 : index
      %c0_38 = arith.constant 0 : index
      %c0_39 = arith.constant 0 : index
      %53 = vector.load %arg13[%c0_37, %c0_38, %c0_39] : memref<4x8x32xf32, #tpu.memory_space<vmem>>, vector<4x8x32xf32>
      tpu.vector_store %arg13[%c0_37, %c0_38, %c0_39], %52 {strides = array<i32>} : memref<4x8x32xf32, #tpu.memory_space<vmem>>, vector<4x8x32xf32>,
      %c0_40 = arith.constant 0 : index
      %c0_41 = arith.constant 0 : index
      %c0_42 = arith.constant 0 : index
      %54 = vector.load %arg14[%c0_40, %c0_41, %c0_42] : memref<4x8x32xf32, #tpu.memory_space<vmem>>, vector<4x8x32xf32>
      %cst_43 = arith.constant 0xFF800000 : f32
      %55 = vector.broadcast %cst_43 : f32 to vector<4x8x32xf32>
      %56 = arith.select %29, %32, %55 : vector<4x8x32xi1>, vector<4x8x32xf32>
      %57 = arith.maximumf %54, %56 : vector<4x8x32xf32>
      %c0_44 = arith.constant 0 : index
      %c0_45 = arith.constant 0 : index
      %c0_46 = arith.constant 0 : index
      %58 = vector.load %arg14[%c0_44, %c0_45, %c0_46] : memref<4x8x32xf32, #tpu.memory_space<vmem>>, vector<4x8x32xf32>
      tpu.vector_store %arg14[%c0_44, %c0_45, %c0_46], %57 {strides = array<i32>} : memref<4x8x32xf32, #tpu.memory_space<vmem>>, vector<4x8x32xf32>,
    } else {
    }
    %c0_i32_10 = arith.constant 0 : i32
    %19 = arith.cmpi eq, %arg1, %c0_i32_10 : i32
    %20 = arith.extui %19 : i1 to i32
    %c0_i32_11 = arith.constant 0 : i32
    %21 = arith.cmpi ne, %20, %c0_i32_11 : i32
    scf.if %21 {
      %c0 = arith.constant 0 : index
      %c0_12 = arith.constant 0 : index
      %22 = vector.load %arg7[%c0, %c0_12] : memref<4x16xf32, #tpu.memory_space<vmem>>, vector<4x16xf32>
      %23 = vector.shape_cast %22 : vector<4x16xf32> to vector<1x4x16xf32>
      %cst = arith.constant dense<0.000000e+00> : vector<1xf32>
      %24 = vector.multi_reduction <add>, %23, %cst [1, 2] : vector<1x4x16xf32> to vector<1xf32>
      %25 = vector.shape_cast %24 : vector<1xf32> to vector<1x1x1xf32>
      %26 = vector.extract %25[0, 0, 0] : f32 from vector<1x1x1xf32>
      %c0_13 = arith.constant 0 : index
      %c0_14 = arith.constant 0 : index
      %27 = vector.load %arg8[%c0_13, %c0_14] : memref<4x16xf32, #tpu.memory_space<vmem>>, vector<4x16xf32>
      %28 = vector.shape_cast %27 : vector<4x16xf32> to vector<1x4x16xf32>
      %cst_15 = arith.constant dense<0.000000e+00> : vector<1xf32>
      %29 = vector.multi_reduction <add>, %28, %cst_15 [1, 2] : vector<1x4x16xf32> to vector<1xf32>
      %30 = vector.shape_cast %29 : vector<1xf32> to vector<1x1x1xf32>
      %31 = vector.extract %30[0, 0, 0] : f32 from vector<1x1x1xf32>
      %32 = arith.subf %31, %26 : f32
      %c0_16 = arith.constant 0 : index
      %c0_17 = arith.constant 0 : index
      %33 = vector.load %arg9[%c0_16, %c0_17] : memref<4x16xf32, #tpu.memory_space<vmem>>, vector<4x16xf32>
      %34 = vector.shape_cast %33 : vector<4x16xf32> to vector<1x4x16xf32>
      %cst_18 = arith.constant dense<0.000000e+00> : vector<1xf32>
      %35 = vector.multi_reduction <add>, %34, %cst_18 [1, 2] : vector<1x4x16xf32> to vector<1xf32>
      %36 = vector.shape_cast %35 : vector<1xf32> to vector<1x1x1xf32>
      %37 = vector.extract %36[0, 0, 0] : f32 from vector<1x1x1xf32>
      %c0_19 = arith.constant 0 : index
      %c0_20 = arith.constant 0 : index
      %38 = vector.load %arg10[%c0_19, %c0_20] : memref<4x16xf32, #tpu.memory_space<vmem>>, vector<4x16xf32>
      %39 = vector.shape_cast %38 : vector<4x16xf32> to vector<1x4x16xf32>
      %cst_21 = arith.constant dense<0.000000e+00> : vector<1xf32>
      %40 = vector.multi_reduction <add>, %39, %cst_21 [1, 2] : vector<1x4x16xf32> to vector<1xf32>
      %41 = vector.shape_cast %40 : vector<1xf32> to vector<1x1x1xf32>
      %42 = vector.extract %41[0, 0, 0] : f32 from vector<1x1x1xf32>
      %c0_22 = arith.constant 0 : index
      %c0_23 = arith.constant 0 : index
      %c0_24 = arith.constant 0 : index
      %43 = vector.load %arg11[%c0_22, %c0_23, %c0_24] : memref<4x8x32xf32, #tpu.memory_space<vmem>>, vector<4x8x32xf32>
      %44 = vector.shape_cast %43 : vector<4x8x32xf32> to vector<1x4x8x32xf32>
      %cst_25 = arith.constant dense<0.000000e+00> : vector<1xf32>
      %45 = vector.multi_reduction <add>, %44, %cst_25 [1, 2, 3] : vector<1x4x8x32xf32> to vector<1xf32>
      %46 = vector.shape_cast %45 : vector<1xf32> to vector<1x1x1x1xf32>
      %47 = vector.extract %46[0, 0, 0, 0] : f32 from vector<1x1x1x1xf32>
      %c0_26 = arith.constant 0 : index
      %c0_27 = arith.constant 0 : index
      %c0_28 = arith.constant 0 : index
      %48 = vector.load %arg12[%c0_26, %c0_27, %c0_28] : memref<4x8x32xf32, #tpu.memory_space<vmem>>, vector<4x8x32xf32>
      %49 = vector.shape_cast %48 : vector<4x8x32xf32> to vector<1x4x8x32xf32>
      %cst_29 = arith.constant dense<0.000000e+00> : vector<1xf32>
      %50 = vector.multi_reduction <add>, %49, %cst_29 [1, 2, 3] : vector<1x4x8x32xf32> to vector<1xf32>
      %51 = vector.shape_cast %50 : vector<1xf32> to vector<1x1x1x1xf32>
      %52 = vector.extract %51[0, 0, 0, 0] : f32 from vector<1x1x1x1xf32>
      %c0_30 = arith.constant 0 : index
      %c0_31 = arith.constant 0 : index
      %c0_32 = arith.constant 0 : index
      %53 = vector.load %arg13[%c0_30, %c0_31, %c0_32] : memref<4x8x32xf32, #tpu.memory_space<vmem>>, vector<4x8x32xf32>
      %54 = vector.shape_cast %53 : vector<4x8x32xf32> to vector<1x4x8x32xf32>
      %cst_33 = arith.constant dense<0.000000e+00> : vector<1xf32>
      %55 = vector.multi_reduction <add>, %54, %cst_33 [1, 2, 3] : vector<1x4x8x32xf32> to vector<1xf32>
      %56 = vector.shape_cast %55 : vector<1xf32> to vector<1x1x1x1xf32>
      %57 = vector.extract %56[0, 0, 0, 0] : f32 from vector<1x1x1x1xf32>
      %c0_34 = arith.constant 0 : index
      %c0_35 = arith.constant 0 : index
      %c0_36 = arith.constant 0 : index
      %58 = vector.load %arg14[%c0_34, %c0_35, %c0_36] : memref<4x8x32xf32, #tpu.memory_space<vmem>>, vector<4x8x32xf32>
      %59 = vector.shape_cast %58 : vector<4x8x32xf32> to vector<1x4x8x32xf32>
      %cst_37 = arith.constant dense<0xFF800000> : vector<1xf32>
      %60 = vector.multi_reduction <maximumf>, %59, %cst_37 [1, 2, 3] : vector<1x4x8x32xf32> to vector<1xf32>
      %61 = vector.shape_cast %60 : vector<1xf32> to vector<1x1x1x1xf32>
      %62 = vector.extract %61[0, 0, 0, 0] : f32 from vector<1x1x1x1xf32>
      %63 = tpu.iota {dimensions = array<i32: 0>} : vector<8x128xi32>
      %cst_38 = arith.constant 0.000000e+00 : f32
      %64 = vector.broadcast %cst_38 : f32 to vector<8x128xf32>
      %c0_i32_39 = arith.constant 0 : i32
      %65 = vector.broadcast %c0_i32_39 : i32 to vector<8x128xi32>
      %66 = arith.cmpi eq, %63, %65 : vector<8x128xi32>
      %67 = vector.broadcast %26 : f32 to vector<8x128xf32>
      %68 = arith.select %66, %67, %64 : vector<8x128xi1>, vector<8x128xf32>
      %c1_i32_40 = arith.constant 1 : i32
      %69 = vector.broadcast %c1_i32_40 : i32 to vector<8x128xi32>
      %70 = arith.cmpi eq, %63, %69 : vector<8x128xi32>
      %71 = vector.broadcast %32 : f32 to vector<8x128xf32>
      %72 = arith.select %70, %71, %68 : vector<8x128xi1>, vector<8x128xf32>
      %c2_i32 = arith.constant 2 : i32
      %73 = vector.broadcast %c2_i32 : i32 to vector<8x128xi32>
      %74 = arith.cmpi eq, %63, %73 : vector<8x128xi32>
      %75 = vector.broadcast %37 : f32 to vector<8x128xf32>
      %76 = arith.select %74, %75, %72 : vector<8x128xi1>, vector<8x128xf32>
      %c3_i32 = arith.constant 3 : i32
      %77 = vector.broadcast %c3_i32 : i32 to vector<8x128xi32>
      %78 = arith.cmpi eq, %63, %77 : vector<8x128xi32>
      %79 = vector.broadcast %42 : f32 to vector<8x128xf32>
      %80 = arith.select %78, %79, %76 : vector<8x128xi1>, vector<8x128xf32>
      %c4_i32 = arith.constant 4 : i32
      %81 = vector.broadcast %c4_i32 : i32 to vector<8x128xi32>
      %82 = arith.cmpi eq, %63, %81 : vector<8x128xi32>
      %83 = vector.broadcast %47 : f32 to vector<8x128xf32>
      %84 = arith.select %82, %83, %80 : vector<8x128xi1>, vector<8x128xf32>
      %c5_i32 = arith.constant 5 : i32
      %85 = vector.broadcast %c5_i32 : i32 to vector<8x128xi32>
      %86 = arith.cmpi eq, %63, %85 : vector<8x128xi32>
      %87 = vector.broadcast %52 : f32 to vector<8x128xf32>
      %88 = arith.select %86, %87, %84 : vector<8x128xi1>, vector<8x128xf32>
      %c6_i32 = arith.constant 6 : i32
      %89 = vector.broadcast %c6_i32 : i32 to vector<8x128xi32>
      %90 = arith.cmpi eq, %63, %89 : vector<8x128xi32>
      %91 = vector.broadcast %57 : f32 to vector<8x128xf32>
      %92 = arith.select %90, %91, %88 : vector<8x128xi1>, vector<8x128xf32>
      %c7_i32 = arith.constant 7 : i32
      %93 = vector.broadcast %c7_i32 : i32 to vector<8x128xi32>
      %94 = arith.cmpi eq, %63, %93 : vector<8x128xi32>
      %95 = vector.broadcast %62 : f32 to vector<8x128xf32>
      %96 = arith.select %94, %95, %92 : vector<8x128xi1>, vector<8x128xf32>
      %c0_41 = arith.constant 0 : index
      %c0_42 = arith.constant 0 : index
      %c0_43 = arith.constant 0 : index
      %97 = vector.load %arg6[%c0_41, %c0_42, %c0_43] : memref<1x8x128xf32, #tpu.memory_space<vmem>>, vector<1x8x128xf32>
      %98 = vector.shape_cast %97 : vector<1x8x128xf32> to vector<8x128xf32>
      %99 = vector.shape_cast %96 : vector<8x128xf32> to vector<1x8x128xf32>
      tpu.vector_store %arg6[%c0_41, %c0_42, %c0_43], %99 {strides = array<i32>} : memref<1x8x128xf32, #tpu.memory_space<vmem>>, vector<1x8x128xf32>,
    } else {
    }
    return
  }
  func.func @transform_0(%arg0: i32, %arg1: i32) -> (i32, i32) {
    %c1_i32 = arith.constant 1 : i32
    %0 = arith.muli %arg0, %c1_i32 : i32
    %1 = arith.addi %0, %arg1 : i32
    %c0_i32 = arith.constant 0 : i32
    %2 = arith.minsi %1, %c0_i32 : i32
    %c0_i32_0 = arith.constant 0 : i32
    %c0_i32_1 = arith.constant 0 : i32
    return %c0_i32_0, %2 : i32, i32
  }
  func.func @transform_1(%arg0: i32, %arg1: i32) -> (i32, i32) {
    %c1_i32 = arith.constant 1 : i32
    %0 = arith.muli %arg0, %c1_i32 : i32
    %1 = arith.addi %0, %arg1 : i32
    %c0_i32 = arith.constant 0 : i32
    %2 = arith.minsi %1, %c0_i32 : i32
    %c0_i32_0 = arith.constant 0 : i32
    %c0_i32_1 = arith.constant 0 : i32
    return %c0_i32_0, %2 : i32, i32
  }
  func.func @transform_2(%arg0: i32, %arg1: i32) -> (i32, i32, i32) {
    %c1_i32 = arith.constant 1 : i32
    %0 = arith.muli %arg0, %c1_i32 : i32
    %1 = arith.addi %0, %arg1 : i32
    %c0_i32 = arith.constant 0 : i32
    %2 = arith.minsi %1, %c0_i32 : i32
    %c0_i32_0 = arith.constant 0 : i32
    %c0_i32_1 = arith.constant 0 : i32
    %c0_i32_2 = arith.constant 0 : i32
    return %c0_i32_0, %2, %c0_i32_1 : i32, i32, i32
  }
  func.func @transform_3(%arg0: i32, %arg1: i32) -> (i32, i32, i32) {
    %c1_i32 = arith.constant 1 : i32
    %0 = arith.muli %arg0, %c1_i32 : i32
    %1 = arith.addi %0, %arg1 : i32
    %c0_i32 = arith.constant 0 : i32
    %2 = arith.minsi %1, %c0_i32 : i32
    %c0_i32_0 = arith.constant 0 : i32
    %c0_i32_1 = arith.constant 0 : i32
    %c0_i32_2 = arith.constant 0 : i32
    return %c0_i32_0, %2, %c0_i32_1 : i32, i32, i32
  }
  func.func @transform_4(%arg0: i32, %arg1: i32) -> (i32, i32, i32) {
    %c0_i32 = arith.constant 0 : i32
    %c0_i32_0 = arith.constant 0 : i32
    %c0_i32_1 = arith.constant 0 : i32
    return %arg0, %c0_i32, %c0_i32_0 : i32, i32, i32
  }
}

</mosaic_0001>

<llo_original>
// kernel: tpu_custom_call.1
$region0: #{tpu_custom_call.1}
  #allocation0 [shape = 'u32[]', space=smem, size = 0x4, offset = 0x4, fixed_abs, tag = 'smem constant byte address 0x4 - core index']
  #allocation1 [shape = 'u32[144,128]{1,0:T(1,128)}', space=vmem, size = 0x12000, scoped, tag = 'internal scratch']
  #allocation2 [shape = 'f32[4,16]{1,0:T(4,128)}', space=vmem, size = 0x800, scoped, tag = 'scratch operand']
  #allocation3 [shape = 'f32[4,16]{1,0:T(4,128)}', space=vmem, size = 0x800, scoped, tag = 'scratch operand']
  #allocation4 [shape = 'f32[4,16]{1,0:T(4,128)}', space=vmem, size = 0x800, scoped, tag = 'scratch operand']
  #allocation5 [shape = 'f32[4,16]{1,0:T(4,128)}', space=vmem, size = 0x800, scoped, tag = 'scratch operand']
  #allocation6 [shape = 'f32[4,8,32]{2,1,0:T(8,128)}', space=vmem, size = 0x4000, scoped, tag = 'scratch operand']
  #allocation7 [shape = 'f32[4,8,32]{2,1,0:T(8,128)}', space=vmem, size = 0x4000, scoped, tag = 'scratch operand']
  #allocation8 [shape = 'f32[4,8,32]{2,1,0:T(8,128)}', space=vmem, size = 0x4000, scoped, tag = 'scratch operand']
  #allocation9 [shape = 'f32[4,8,32]{2,1,0:T(8,128)}', space=vmem, size = 0x4000, scoped, tag = 'scratch operand']
  %s0 = inlined_call_operand.hbm [shape: f32[4,16], index: 0, kind: input, shape index: {}]
  %s1 = inlined_call_operand.hbm [shape: f32[4,16], index: 1, kind: input, shape index: {}]
  %s2 = inlined_call_operand.hbm [shape: f32[4,8,32], index: 2, kind: input, shape index: {}]
  %s3 = inlined_call_operand.hbm [shape: f32[4,8,32], index: 3, kind: input, shape index: {}]
  %s4 = inlined_call_operand.hbm [shape: f32[2,8,128], index: 4, kind: output, shape index: {}]
  %s5 = sld [smem:[#allocation0]]
  $region77: #{tpu_custom_call.1} parent=0
    _
  %s7 = ssub.s32 1, %s5
  %s8 = scalar_select 0, %s7, %s5
  $region1: #{tpu_custom_call.1} parent=0
    #allocation10 [shape = 'u8[4096]{0}', space=vmem, size = 0x1000, scoped, tag = 'input window, operand 0']
    #allocation11 [shape = 's32[2]{0}', space=sflag, size = 0x8, scoped, tag = 'scoped memory for tpu_custom_call.1']
    #allocation12 [shape = 's32[2]{0}', space=sflag, size = 0x8, scoped, tag = 'scoped memory for tpu_custom_call.1']
    #allocation13 [shape = 'u8[4096]{0}', space=vmem, size = 0x1000, scoped, tag = 'input window, operand 1']
    #allocation14 [shape = 's32[2]{0}', space=sflag, size = 0x8, scoped, tag = 'scoped memory for tpu_custom_call.1']
    #allocation15 [shape = 'u8[32768]{0}', space=vmem, size = 0x8000, scoped, tag = 'input window, operand 2']
    #allocation16 [shape = 'u8[32768]{0}', space=vmem, size = 0x8000, scoped, tag = 'input window, operand 3']
    #allocation17 [shape = 's32[2]{0}', space=sflag, size = 0x8, scoped, tag = 'scoped memory for tpu_custom_call.1']
    #allocation18 [shape = 'u8[8192]{0}', space=vmem, size = 0x2000, scoped, tag = 'output window, operand 0']
    %9 = vsyncpa [#allocation11], 0
    %s10 = scalar_lea.sflag [#allocation11], 1
    %11 = vsyncpa %s10, 0
    %12 = vsyncpa [#allocation14], 0
    %s13 = scalar_lea.sflag [#allocation14], 1
    %14 = vsyncpa %s13, 0
    %15 = vsyncpa [#allocation17], 0
    %s16 = scalar_lea.sflag [#allocation17], 1
    %17 = vsyncpa %s16, 0
    %18 = vsyncpa [#allocation12], 0
    %s19 = scalar_lea.sflag [#allocation12], 1
    %20 = vsyncpa %s19, 0
    loop: start=0, step=1, limit=4
    $region2: #{tpu_custom_call.1} parent=1 // loop_pre_header
      _
    $region3: #{tpu_custom_call.1} parent=1 // loop_header
      %s22 = sphi 0, %s26
      %p23 = scmp.ge.s32.totalorder %s22, 4
      %s29 = sphi 0, %s41
      %s30 = sphi 0, %s37
      %s31 = sphi 0, %s29
      %s32 = sphi 0, %s30
      %s33 = sphi 0, %s31
      %s34 = sphi 0, %s32
      %s50 = sphi 0, %s52
      %s53 = sphi 0, %s50
      %s54 = sphi 0, %s53
      %s70 = sphi 0, %s54
      %s82 = sphi 0, %s84
      %s85 = sphi 0, %s82
      %s86 = sphi 0, %s85
      %s102 = sphi 0, %s86
      %s114 = sphi 0, %s116
      %s117 = sphi 0, %s114
      %s118 = sphi 0, %s117
      %s134 = sphi 0, %s118
      %s146 = sphi 0, %s148
      %s149 = sphi 0, %s146
      %s150 = sphi 0, %s149
      %s166 = sphi 0, %s150
      %s172 = sphi 0, %s174
      %s175 = sphi 0, %s172
      %s176 = sphi 0, %s175
      %s192 = sphi 0, %s176
    $region4: #{tpu_custom_call.1} parent=1 // loop_header_branch
      %25 = sbr.rel (%p23) target = $region8
    $region5: #{tpu_custom_call.1} parent=1 // loop_body
      %s27 = ssub.s32 %s22, 1
      %s28 = ssub.s32 %s22, 2
      %s35 = sadd.s32 1, %s30
      %p36 = scmp.ge.s32.totalorder %s35, 1
      %s37 = scalar_select %p36, 0, %s35
      %s38 = sadd.s32 1, %s29
      %s39 = scalar_select %p36, %s38, %s29
      %p40 = scmp.ge.s32.totalorder %s39, 2
      %s41 = scalar_select %p40, 0, %s39
      %s42 = sadd.s32 %s29, %s30
      %p43 = scmp.lt.s32.totalorder %s42, 0
      %s44 = scalar_select %p43, %s42, 0
      %s45 = sadd.s32 %s41, %s37
      %p46 = scmp.lt.s32.totalorder %s45, 0
      %s47 = scalar_select %p46, %s45, 0
      %s48 = ssub.s32 %s44, %s47
      %p49 = scmp.eq.s32.totalorder %s48, 0
      %s51 = sadd.s32 %s50, 1
      %s52 = scalar_select %p49, %s50, %s51
      %p55 = pneg %p49
      %p56 = scmp.eq.s32.totalorder %s22, 1
      %p57 = por %p55, %p56
      %p58 = scmp.ne.s32.totalorder %s50, %s53
      %p59 = scmp.eq.s32.totalorder %s22, 0
      %p60 = por %p58, %p59
      %p61 = scmp.ne.s32.totalorder %s50, %s53
      %p62 = scmp.eq.s32.totalorder %s27, 1
      %p63 = por %p61, %p62
      %p64 = scmp.ne.s32.totalorder %s53, %s54
      %p65 = scmp.eq.s32.totalorder %s27, 0
      %p66 = por %p64, %p65
      %p67 = scmp.ne.s32.totalorder %s53, %s54
      %p68 = scmp.eq.s32.totalorder %s28, 1
      %p69 = por %p67, %p68
      %p71 = scmp.ne.s32.totalorder %s54, %s70
      %p72 = scmp.eq.s32.totalorder %s28, 0
      %p73 = por %p71, %p72
      %s74 = sadd.s32 %s29, %s30
      %p75 = scmp.lt.s32.totalorder %s74, 0
      %s76 = scalar_select %p75, %s74, 0
      %s77 = sadd.s32 %s41, %s37
      %p78 = scmp.lt.s32.totalorder %s77, 0
      %s79 = scalar_select %p78, %s77, 0
      %s80 = ssub.s32 %s76, %s79
      %p81 = scmp.eq.s32.totalorder %s80, 0
      %s83 = sadd.s32 %s82, 1
      %s84 = scalar_select %p81, %s82, %s83
      %p87 = pneg %p81
      %p88 = scmp.eq.s32.totalorder %s22, 1
      %p89 = por %p87, %p88
      %p90 = scmp.ne.s32.totalorder %s82, %s85
      %p91 = scmp.eq.s32.totalorder %s22, 0
      %p92 = por %p90, %p91
      %p93 = scmp.ne.s32.totalorder %s82, %s85
      %p94 = scmp.eq.s32.totalorder %s27, 1
      %p95 = por %p93, %p94
      %p96 = scmp.ne.s32.totalorder %s85, %s86
      %p97 = scmp.eq.s32.totalorder %s27, 0
      %p98 = por %p96, %p97
      %p99 = scmp.ne.s32.totalorder %s85, %s86
      %p100 = scmp.eq.s32.totalorder %s28, 1
      %p101 = por %p99, %p100
      %p103 = scmp.ne.s32.totalorder %s86, %s102
      %p104 = scmp.eq.s32.totalorder %s28, 0
      %p105 = por %p103, %p104
      %s106 = sadd.s32 %s29, %s30
      %p107 = scmp.lt.s32.totalorder %s106, 0
      %s108 = scalar_select %p107, %s106, 0
      %s109 = sadd.s32 %s41, %s37
      %p110 = scmp.lt.s32.totalorder %s109, 0
      %s111 = scalar_select %p110, %s109, 0
      %s112 = ssub.s32 %s108, %s111
      %p113 = scmp.eq.s32.totalorder %s112, 0
      %s115 = sadd.s32 %s114, 1
      %s116 = scalar_select %p113, %s114, %s115
      %p119 = pneg %p113
      %p120 = scmp.eq.s32.totalorder %s22, 1
      %p121 = por %p119, %p120
      %p122 = scmp.ne.s32.totalorder %s114, %s117
      %p123 = scmp.eq.s32.totalorder %s22, 0
      %p124 = por %p122, %p123
      %p125 = scmp.ne.s32.totalorder %s114, %s117
      %p126 = scmp.eq.s32.totalorder %s27, 1
      %p127 = por %p125, %p126
      %p128 = scmp.ne.s32.totalorder %s117, %s118
      %p129 = scmp.eq.s32.totalorder %s27, 0
      %p130 = por %p128, %p129
      %p131 = scmp.ne.s32.totalorder %s117, %s118
      %p132 = scmp.eq.s32.totalorder %s28, 1
      %p133 = por %p131, %p132
      %p135 = scmp.ne.s32.totalorder %s118, %s134
      %p136 = scmp.eq.s32.totalorder %s28, 0
      %p137 = por %p135, %p136
      %s138 = sadd.s32 %s29, %s30
      %p139 = scmp.lt.s32.totalorder %s138, 0
      %s140 = scalar_select %p139, %s138, 0
      %s141 = sadd.s32 %s41, %s37
      %p142 = scmp.lt.s32.totalorder %s141, 0
      %s143 = scalar_select %p142, %s141, 0
      %s144 = ssub.s32 %s140, %s143
      %p145 = scmp.eq.s32.totalorder %s144, 0
      %s147 = sadd.s32 %s146, 1
      %s148 = scalar_select %p145, %s146, %s147
      %p151 = pneg %p145
      %p152 = scmp.eq.s32.totalorder %s22, 1
      %p153 = por %p151, %p152
      %p154 = scmp.ne.s32.totalorder %s146, %s149
      %p155 = scmp.eq.s32.totalorder %s22, 0
      %p156 = por %p154, %p155
      %p157 = scmp.ne.s32.totalorder %s146, %s149
      %p158 = scmp.eq.s32.totalorder %s27, 1
      %p159 = por %p157, %p158
      %p160 = scmp.ne.s32.totalorder %s149, %s150
      %p161 = scmp.eq.s32.totalorder %s27, 0
      %p162 = por %p160, %p161
      %p163 = scmp.ne.s32.totalorder %s149, %s150
      %p164 = scmp.eq.s32.totalorder %s28, 1
      %p165 = por %p163, %p164
      %p167 = scmp.ne.s32.totalorder %s150, %s166
      %p168 = scmp.eq.s32.totalorder %s28, 0
      %p169 = por %p167, %p168
      %s170 = ssub.s32 %s29, %s41
      %p171 = scmp.eq.s32.totalorder %s170, 0
      %s173 = sadd.s32 %s172, 1
      %s174 = scalar_select %p171, %s172, %s173
      %p177 = pneg %p171
      %p178 = scmp.eq.s32.totalorder %s22, 1
      %p179 = por %p177, %p178
      %p180 = scmp.ne.s32.totalorder %s172, %s175
      %p181 = scmp.eq.s32.totalorder %s22, 0
      %p182 = por %p180, %p181
      %p183 = scmp.ne.s32.totalorder %s172, %s175
      %p184 = scmp.eq.s32.totalorder %s27, 1
      %p185 = por %p183, %p184
      %p186 = scmp.ne.s32.totalorder %s175, %s176
      %p187 = scmp.eq.s32.totalorder %s27, 0
      %p188 = por %p186, %p187
      %p189 = scmp.ne.s32.totalorder %s175, %s176
      %p190 = scmp.eq.s32.totalorder %s28, 1
      %p191 = por %p189, %p190
      %p193 = scmp.ne.s32.totalorder %s176, %s192
      %p194 = scmp.eq.s32.totalorder %s28, 0
      %p195 = por %p193, %p194
      %p196 = scmp.le.s32.totalorder 1, %s22
      %p197 = scmp.lt.s32.totalorder %s22, 3
      %p198 = pnand %p196, %p197
      %p199 = pneg %p198
      // Predicated region
      $region9: #{tpu_custom_call.1} parent=5 // pred_check
        _
      $region10: #{tpu_custom_call.1} parent=5 // pred_check_branch
        %201 = sbr.rel (%p198) target = $region12
      $region11: #{tpu_custom_call.1} parent=5 // pred_region
        %s202 = ssub.s32 %s22, 1
      $region12: #{tpu_custom_call.1} parent=5 // pred_fallthru
        _
      %p203 = scmp.lt.s32.totalorder %s22, 2
      // Predicated region
      $region13: #{tpu_custom_call.1} parent=5 // pred_check
        %p204 = pneg %p203
      $region14: #{tpu_custom_call.1} parent=5 // pred_check_branch
        %206 = sbr.rel (%p204) target = $region16
      $region15: #{tpu_custom_call.1} parent=5 // pred_region
        // Predicated region
        $region17: #{tpu_custom_call.1} parent=15 // pred_check
          %p207 = pneg %p60
        $region18: #{tpu_custom_call.1} parent=15 // pred_check_branch
          %209 = sbr.rel (%p207) target = $region20
        $region19: #{tpu_custom_call.1} parent=15 // pred_region
          %s210 = sand.u32 %s50, 1
          %s211 = scalar_lea.sflag [#allocation11], %s210
          %s212 = sand.u32 %s50, 1
          %s213 = smul.addr %s212, 4
          %s214 = scalar_lea.vmem [#allocation10], %s213
          %s215 = sadd.s32 %s29, %s30
          %p216 = scmp.lt.s32.totalorder %s215, 0
          %s217 = scalar_select %p216, %s215, 0
          %s219 = ssub.s32 64, 64
          %220 = vsyncadd %s211, %s219
          %s221 = smul.addr %s217, 64
          %s222 = scalar_lea.hbm %s0, %s221
          %s224 = sshll.u32 %s214, 4
          %s225 = int_to_ptr.vmem [resolvable:$true] %s224
          %227 = dma.hbm_to_vmem [thread:$0]  %s222, 64, %s225, %s211
        $region20: #{tpu_custom_call.1} parent=15 // pred_fallthru
          _
        // Predicated region
        $region21: #{tpu_custom_call.1} parent=15 // pred_check
          %p228 = pneg %p92
        $region22: #{tpu_custom_call.1} parent=15 // pred_check_branch
          %230 = sbr.rel (%p228) target = $region24
        $region23: #{tpu_custom_call.1} parent=15 // pred_region
          %s231 = sand.u32 %s22, 1
          %s232 = scalar_lea.sflag [#allocation14], %s231
          %s233 = sand.u32 %s82, 1
          %s234 = smul.addr %s233, 4
          %s235 = scalar_lea.vmem [#allocation13], %s234
          %s236 = sadd.s32 %s29, %s30
          %p237 = scmp.lt.s32.totalorder %s236, 0
          %s238 = scalar_select %p237, %s236, 0
          %s240 = ssub.s32 64, 64
          %241 = vsyncadd %s232, %s240
          %s242 = smul.addr %s238, 64
          %s243 = scalar_lea.hbm %s1, %s242
          %s245 = sshll.u32 %s235, 4
          %s246 = int_to_ptr.vmem [resolvable:$true] %s245
          %248 = dma.hbm_to_vmem [thread:$0]  %s243, 64, %s246, %s232
        $region24: #{tpu_custom_call.1} parent=15 // pred_fallthru
          _
        // Predicated region
        $region25: #{tpu_custom_call.1} parent=15 // pred_check
          %p249 = pneg %p124
        $region26: #{tpu_custom_call.1} parent=15 // pred_check_branch
          %251 = sbr.rel (%p249) target = $region28
        $region27: #{tpu_custom_call.1} parent=15 // pred_region
          %s252 = sand.u32 %s22, 1
          %s253 = scalar_lea.sflag [#allocation14], %s252
          %s254 = sand.u32 %s114, 1
          %s255 = smul.addr %s254, 32
          %s256 = scalar_lea.vmem [#allocation15], %s255
          %s257 = sadd.s32 %s29, %s30
          %p258 = scmp.lt.s32.totalorder %s257, 0
          %s259 = scalar_select %p258, %s257, 0
          %s261 = ssub.s32 512, 512
          %262 = vsyncadd %s253, %s261
          %s263 = smul.addr %s259, 128
          %s264 = scalar_lea.hbm %s2, %s263
          %s265 = sshll.u32 %s256, 4
          %s266 = int_to_ptr.vmem [resolvable:$true] %s265
          %271 = dma.hbm_to_vmem [thread:$0]  %s264, 512, %s266, %s253, 128, 128, 8
        $region28: #{tpu_custom_call.1} parent=15 // pred_fallthru
          _
        // Predicated region
        $region29: #{tpu_custom_call.1} parent=15 // pred_check
          %p272 = pneg %p156
        $region30: #{tpu_custom_call.1} parent=15 // pred_check_branch
          %274 = sbr.rel (%p272) target = $region32
        $region31: #{tpu_custom_call.1} parent=15 // pred_region
          %s275 = sand.u32 %s146, 1
          %s276 = scalar_lea.sflag [#allocation17], %s275
          %s277 = sand.u32 %s146, 1
          %s278 = smul.addr %s277, 32
          %s279 = scalar_lea.vmem [#allocation16], %s278
          %s280 = sadd.s32 %s29, %s30
          %p281 = scmp.lt.s32.totalorder %s280, 0
          %s282 = scalar_select %p281, %s280, 0
          %s284 = ssub.s32 512, 512
          %285 = vsyncadd %s276, %s284
          %s286 = smul.addr %s282, 128
          %s287 = scalar_lea.hbm %s3, %s286
          %s288 = sshll.u32 %s279, 4
          %s289 = int_to_ptr.vmem [resolvable:$true] %s288
          %294 = dma.hbm_to_vmem [thread:$0]  %s287, 512, %s289, %s276, 128, 128, 8
        $region32: #{tpu_custom_call.1} parent=15 // pred_fallthru
          _
      $region16: #{tpu_custom_call.1} parent=5 // pred_fallthru
        _
      %p295 = scmp.le.s32.totalorder 1, %s22
      %p296 = scmp.lt.s32.totalorder %s22, 3
      %p297 = pnand %p295, %p296
      %p298 = pneg %p297
      // Predicated region
      $region33: #{tpu_custom_call.1} parent=5 // pred_check
        _
      $region34: #{tpu_custom_call.1} parent=5 // pred_check_branch
        %300 = sbr.rel (%p297) target = $region36
      $region35: #{tpu_custom_call.1} parent=5 // pred_region
        %s301 = ssub.s32 %s22, 1
        %s302 = sand.u32 %s53, 1
        %s303 = scalar_lea.sflag [#allocation11], %s302
        %s304 = sand.u32 %s53, 1
        %s305 = smul.addr %s304, 4
        %s306 = scalar_lea.vmem [#allocation10], %s305
        // Predicated region
        $region37: #{tpu_custom_call.1} parent=35 // pred_check
          %p307 = pneg %p66
        $region38: #{tpu_custom_call.1} parent=35 // pred_check_branch
          %309 = sbr.rel (%p307) target = $region40
        $region39: #{tpu_custom_call.1} parent=35 // pred_region
          %310 = dma.done %s303, 64
        $region40: #{tpu_custom_call.1} parent=35 // pred_fallthru
          _
        %s311 = sand.u32 %s27, 1
        %s312 = scalar_lea.sflag [#allocation14], %s311
        %s313 = sand.u32 %s85, 1
        %s314 = smul.addr %s313, 4
        %s315 = scalar_lea.vmem [#allocation13], %s314
        // Predicated region
        $region41: #{tpu_custom_call.1} parent=35 // pred_check
          %p316 = pneg %p98
        $region42: #{tpu_custom_call.1} parent=35 // pred_check_branch
          %318 = sbr.rel (%p316) target = $region44
        $region43: #{tpu_custom_call.1} parent=35 // pred_region
          %319 = dma.done %s312, 64
        $region44: #{tpu_custom_call.1} parent=35 // pred_fallthru
          _
        %s320 = sand.u32 %s27, 1
        %s321 = scalar_lea.sflag [#allocation14], %s320
        %s322 = sand.u32 %s117, 1
        %s323 = smul.addr %s322, 32
        %s324 = scalar_lea.vmem [#allocation15], %s323
        // Predicated region
        $region45: #{tpu_custom_call.1} parent=35 // pred_check
          %p325 = pneg %p130
        $region46: #{tpu_custom_call.1} parent=35 // pred_check_branch
          %327 = sbr.rel (%p325) target = $region48
        $region47: #{tpu_custom_call.1} parent=35 // pred_region
          %328 = dma.done %s321, 512
        $region48: #{tpu_custom_call.1} parent=35 // pred_fallthru
          _
        %s329 = sand.u32 %s149, 1
        %s330 = scalar_lea.sflag [#allocation17], %s329
        %s331 = sand.u32 %s149, 1
        %s332 = smul.addr %s331, 32
        %s333 = scalar_lea.vmem [#allocation16], %s332
        // Predicated region
        $region49: #{tpu_custom_call.1} parent=35 // pred_check
          %p334 = pneg %p162
        $region50: #{tpu_custom_call.1} parent=35 // pred_check_branch
          %336 = sbr.rel (%p334) target = $region52
        $region51: #{tpu_custom_call.1} parent=35 // pred_region
          %337 = dma.done %s330, 512
        $region52: #{tpu_custom_call.1} parent=35 // pred_fallthru
          _
        %s338 = sand.u32 %s53, 1
        %s339 = scalar_lea.sflag [#allocation11], %s338
        %s340 = sand.u32 %s53, 1
        %s341 = smul.addr %s340, 4
        %s342 = scalar_lea.vmem [#allocation10], %s341
        %p343 = pneg %p66
        %p344 = pneg %p63
        %s345 = sand.u32 %s27, 1
        %s346 = scalar_lea.sflag [#allocation14], %s345
        %s347 = sand.u32 %s85, 1
        %s348 = smul.addr %s347, 4
        %s349 = scalar_lea.vmem [#allocation13], %s348
        %p350 = pneg %p98
        %p351 = pneg %p95
        %s352 = sand.u32 %s27, 1
        %s353 = scalar_lea.sflag [#allocation14], %s352
        %s354 = sand.u32 %s117, 1
        %s355 = smul.addr %s354, 32
        %s356 = scalar_lea.vmem [#allocation15], %s355
        %p357 = pneg %p130
        %p358 = pneg %p127
        %s359 = sand.u32 %s149, 1
        %s360 = scalar_lea.sflag [#allocation17], %s359
        %s361 = sand.u32 %s149, 1
        %s362 = smul.addr %s361, 32
        %s363 = scalar_lea.vmem [#allocation16], %s362
        %p364 = pneg %p162
        %p365 = pneg %p159
        %p366 = pneg %p188
        %p367 = pneg %p185
        %s368 = sand.u32 %s175, 1
        %s369 = scalar_lea.sflag [#allocation12], %s368
        %s370 = sand.u32 %s175, 1
        %s371 = smul.addr %s370, 8
        %s372 = scalar_lea.vmem [#allocation18], %s371
        %s373 = sadd.s32 %s31, %s32
        %p374 = scmp.lt.s32.totalorder %s373, 0
        %s375 = scalar_select %p374, %s373, 0
        %s376 = sadd.s32 %s31, %s32
        %p377 = scmp.lt.s32.totalorder %s376, 0
        %s378 = scalar_select %p377, %s376, 0
        %s379 = sadd.s32 %s31, %s32
        %p380 = scmp.lt.s32.totalorder %s379, 0
        %s381 = scalar_select %p380, %s379, 0
        %s382 = sadd.s32 %s31, %s32
        %p383 = scmp.lt.s32.totalorder %s382, 0
        %s384 = scalar_select %p383, %s382, 0
        %p385 = scmp.eq.s32.totalorder %s32, 0
        // Predicated region
        $region53: #{tpu_custom_call.1} parent=35 // pred_check
          %p386 = pneg %p385
        $region54: #{tpu_custom_call.1} parent=35 // pred_check_branch
          %388 = sbr.rel (%p386) target = $region56
        $region55: #{tpu_custom_call.1} parent=35 // pred_region
          %vm389 = vcmask 125952
          %390 = vst.msk [vmem:[#allocation2] sm:$0xf] %vm389, 0.0
          %391 = vst.msk [vmem:[#allocation3] sm:$0xf] %vm389, 0.0
          %392 = vst.msk [vmem:[#allocation4] sm:$0xf] %vm389, 0.0
          %393 = vst.msk [vmem:[#allocation5] sm:$0xf] %vm389, 0.0
          %vm394 = vcmask 261120
          %395 = vst.msk [vmem:[#allocation6] sm:$0xff] %vm394, 0.0
          %396 = vst.msk [vmem:[#allocation6 + $0x8] sm:$0xff] %vm394, 0.0
          %397 = vst.msk [vmem:[#allocation6 + $0x10] sm:$0xff] %vm394, 0.0
          %398 = vst.msk [vmem:[#allocation6 + $0x18] sm:$0xff] %vm394, 0.0
          %399 = vst.msk [vmem:[#allocation7] sm:$0xff] %vm394, 0.0
          %400 = vst.msk [vmem:[#allocation7 + $0x8] sm:$0xff] %vm394, 0.0
          %401 = vst.msk [vmem:[#allocation7 + $0x10] sm:$0xff] %vm394, 0.0
          %402 = vst.msk [vmem:[#allocation7 + $0x18] sm:$0xff] %vm394, 0.0
          %403 = vst.msk [vmem:[#allocation8] sm:$0xff] %vm394, 0.0
          %404 = vst.msk [vmem:[#allocation8 + $0x8] sm:$0xff] %vm394, 0.0
          %405 = vst.msk [vmem:[#allocation8 + $0x10] sm:$0xff] %vm394, 0.0
          %406 = vst.msk [vmem:[#allocation8 + $0x18] sm:$0xff] %vm394, 0.0
          %407 = vst.msk [vmem:[#allocation9] sm:$0xff] %vm394, -inf
          %408 = vst.msk [vmem:[#allocation9 + $0x8] sm:$0xff] %vm394, -inf
          %409 = vst.msk [vmem:[#allocation9 + $0x10] sm:$0xff] %vm394, -inf
          %410 = vst.msk [vmem:[#allocation9 + $0x18] sm:$0xff] %vm394, -inf
        $region56: #{tpu_custom_call.1} parent=35 // pred_fallthru
          _
        %s411 = sadd.s32 %s31, %s32
        %p412 = scmp.lt.s32.totalorder %s411, 0
        %s413 = scalar_select %p412, %s411, 0
        %p414 = scmp.lt.s32.totalorder %s32, 1
        %p415 = scmp.lt.s32.totalorder %s411, 1
        %p416 = pnand %p414, %p415
        %p417 = pneg %p416
        // Predicated region
        $region57: #{tpu_custom_call.1} parent=35 // pred_check
          _
        $region58: #{tpu_custom_call.1} parent=35 // pred_check_branch
          %419 = sbr.rel (%p416) target = $region60
        $region59: #{tpu_custom_call.1} parent=35 // pred_region
          %v420 = vld [vmem:[%s306] sm:$0xf]
          %v421 = vld [vmem:[%s315] sm:$0xf]
          %s422 = smul.u32 %s413, 16
          %v423 = vlaneseq
          %v424 = vand.u32 %v423, 127
          %v425 = vstv %s422
          %v426 = vadd.s32 %v425, %v424
          %vm427 = vcmp.lt.s32.totalorder %v426, 16
          %vm428 = vcmp.lt.s32.totalorder %v426, 8
          %vm429 = vmand %vm427, %vm428
          %v430 = vmax.f32 %v420, 0.0
          %v431 = vmul.f32 %v420, %v421
          %v432 = vsub.f32 %v430, %v431
          %v433 = vand.u32 2147483647, %v420
          %v434 = vsub.f32 0.0, %v433
          %v435 = vmul.f32 %v434, 1.442695
          %v436 = vpow.pop %v435
          %v437 = vadd.f32 %v436, 1.0
          %v438 = vlog2.pop %v437
          %v439 = vmul.f32 %v438, 0.6931472
          %v440 = vmul.f32 -0.5, %v436
          %v441 = vadd.f32 %v440, 1.0
          %v442 = vmul.f32 %v441, %v436
          %v443 = vand.u32 2147483647, %v436
          %vm444 = vcmp.lt.f32.partialorder %v443, 0.0004427343
          %v445 = vsel %vm444, %v442, %v439
          %v446 = vadd.f32 %v432, %v445
          %vm447 = vcmp.ge.f32.partialorder %v420, 0.0
          %v448 = vsel %vm447, 1, 0
          %v449 = vcvt.s32.f32 %v448
          %v450 = vld [vmem:[#allocation3] sm:$0xf]
          %v451 = vsel %vm427, %v446, 0.0
          %v452 = vadd.f32 %v450, %v451
          %vm453 = vcmask 125952
          %454 = vst.msk [vmem:[#allocation3] sm:$0xf] %vm453, %v452
          %v455 = vld [vmem:[#allocation2] sm:$0xf]
          %v456 = vsel %vm429, %v446, 0.0
          %v457 = vadd.f32 %v455, %v456
          %458 = vst.msk [vmem:[#allocation2] sm:$0xf] %vm453, %v457
          %v459 = vld [vmem:[#allocation4] sm:$0xf]
          %vm460 = vcmp.eq.f32.partialorder %v449, %v421
          %v461 = vsel %vm460, 1, 0
          %v462 = vcvt.s32.f32 %v461
          %v463 = vsel %vm427, %v462, 0.0
          %v464 = vadd.f32 %v459, %v463
          %465 = vst.msk [vmem:[#allocation4] sm:$0xf] %vm453, %v464
          %v466 = vld [vmem:[#allocation5] sm:$0xf]
          %v467 = vsel %vm427, %v421, 0.0
          %v468 = vadd.f32 %v466, %v467
          %469 = vst.msk [vmem:[#allocation5] sm:$0xf] %vm453, %v468
          %v470 = vld [vmem:[%s324] sm:$0xff]
          %v471 = vld [vmem:[%s324 + $0x8] sm:$0xff]
          %v472 = vld [vmem:[%s324 + $0x10] sm:$0xff]
          %v473 = vld [vmem:[%s324 + $0x18] sm:$0xff]
          %v474 = vld [vmem:[%s333] sm:$0xff]
          %v475 = vld [vmem:[%s333 + $0x8] sm:$0xff]
          %v476 = vld [vmem:[%s333 + $0x10] sm:$0xff]
          %v477 = vld [vmem:[%s333 + $0x18] sm:$0xff]
          %s478 = smul.u32 %s413, 8
          %v479 = vlaneseq
          %v480 = vshrl.u32 %v479, 7
          %v481 = vstv %s478
          %v482 = vadd.s32 %v481, %v480
          %vm483 = vcmp.lt.s32.totalorder %v482, 8
          %v484 = vmul.f32 %v474, 0.5
          %v485 = vmul.f32 %v475, 0.5
          %v486 = vmul.f32 %v476, 0.5
          %v487 = vmul.f32 %v477, 0.5
          %v488 = vmul.f32 %v484, 1.442695
          %v489 = vpow.pop %v488
          %v490 = vmul.f32 %v485, 1.442695
          %v491 = vpow.pop %v490
          %v492 = vmul.f32 %v486, 1.442695
          %v493 = vpow.pop %v492
          %v494 = vmul.f32 %v487, 1.442695
          %v495 = vpow.pop %v494
          %v496 = vmul.f32 %v489, %v489
          %v497 = vmul.f32 %v491, %v491
          %v498 = vmul.f32 %v493, %v493
          %v499 = vmul.f32 %v495, %v495
          %v500 = vmul.f32 %v470, %v470
          %v501 = vmul.f32 %v471, %v471
          %v502 = vmul.f32 %v472, %v472
          %v503 = vmul.f32 %v473, %v473
          %v504 = vadd.f32 %v500, %v496
          %v505 = vadd.f32 %v501, %v497
          %v506 = vadd.f32 %v502, %v498
          %v507 = vadd.f32 %v503, %v499
          %v508 = vsub.f32 %v504, 1.0
          %v509 = vsub.f32 %v505, 1.0
          %v510 = vsub.f32 %v506, 1.0
          %v511 = vsub.f32 %v507, 1.0
          %v512 = vsub.f32 %v508, %v474
          %v513 = vsub.f32 %v509, %v475
          %v514 = vsub.f32 %v510, %v476
          %v515 = vsub.f32 %v511, %v477
          %v516 = vld [vmem:[#allocation6] sm:$0xff]
          %v517 = vld [vmem:[#allocation6 + $0x8] sm:$0xff]
          %v518 = vld [vmem:[#allocation6 + $0x10] sm:$0xff]
          %v519 = vld [vmem:[#allocation6 + $0x18] sm:$0xff]
          %v520 = vsel %vm483, %v512, 0.0
          %v521 = vsel %vm483, %v513, 0.0
          %v522 = vsel %vm483, %v514, 0.0
          %v523 = vsel %vm483, %v515, 0.0
          %v524 = vadd.f32 %v516, %v520
          %v525 = vadd.f32 %v517, %v521
          %v526 = vadd.f32 %v518, %v522
          %v527 = vadd.f32 %v519, %v523
          %vm528 = vcmask 261120
          %529 = vst.msk [vmem:[#allocation6] sm:$0xff] %vm528, %v524
          %530 = vst.msk [vmem:[#allocation6 + $0x8] sm:$0xff] %vm528, %v525
          %531 = vst.msk [vmem:[#allocation6 + $0x10] sm:$0xff] %vm528, %v526
          %532 = vst.msk [vmem:[#allocation6 + $0x18] sm:$0xff] %vm528, %v527
          %v533 = vld [vmem:[#allocation7] sm:$0xff]
          %v534 = vld [vmem:[#allocation7 + $0x8] sm:$0xff]
          %v535 = vld [vmem:[#allocation7 + $0x10] sm:$0xff]
          %v536 = vld [vmem:[#allocation7 + $0x18] sm:$0xff]
          %v537 = vsel %vm483, %v470, 0.0
          %v538 = vsel %vm483, %v471, 0.0
          %v539 = vsel %vm483, %v472, 0.0
          %v540 = vsel %vm483, %v473, 0.0
          %v541 = vadd.f32 %v533, %v537
          %v542 = vadd.f32 %v534, %v538
          %v543 = vadd.f32 %v535, %v539
          %v544 = vadd.f32 %v536, %v540
          %545 = vst.msk [vmem:[#allocation7] sm:$0xff] %vm528, %v541
          %546 = vst.msk [vmem:[#allocation7 + $0x8] sm:$0xff] %vm528, %v542
          %547 = vst.msk [vmem:[#allocation7 + $0x10] sm:$0xff] %vm528, %v543
          %548 = vst.msk [vmem:[#allocation7 + $0x18] sm:$0xff] %vm528, %v544
          %v549 = vld [vmem:[#allocation8] sm:$0xff]
          %v550 = vld [vmem:[#allocation8 + $0x8] sm:$0xff]
          %v551 = vld [vmem:[#allocation8 + $0x10] sm:$0xff]
          %v552 = vld [vmem:[#allocation8 + $0x18] sm:$0xff]
          %v553 = vsel %vm483, %v489, 0.0
          %v554 = vsel %vm483, %v491, 0.0
          %v555 = vsel %vm483, %v493, 0.0
          %v556 = vsel %vm483, %v495, 0.0
          %v557 = vadd.f32 %v549, %v553
          %v558 = vadd.f32 %v550, %v554
          %v559 = vadd.f32 %v551, %v555
          %v560 = vadd.f32 %v552, %v556
          %561 = vst.msk [vmem:[#allocation8] sm:$0xff] %vm528, %v557
          %562 = vst.msk [vmem:[#allocation8 + $0x8] sm:$0xff] %vm528, %v558
          %563 = vst.msk [vmem:[#allocation8 + $0x10] sm:$0xff] %vm528, %v559
          %564 = vst.msk [vmem:[#allocation8 + $0x18] sm:$0xff] %vm528, %v560
          %v565 = vld [vmem:[#allocation9] sm:$0xff]
          %v566 = vld [vmem:[#allocation9 + $0x8] sm:$0xff]
          %v567 = vld [vmem:[#allocation9 + $0x10] sm:$0xff]
          %v568 = vld [vmem:[#allocation9 + $0x18] sm:$0xff]
          %v569 = vsel %vm483, %v489, -inf
          %v570 = vsel %vm483, %v491, -inf
          %v571 = vsel %vm483, %v493, -inf
          %v572 = vsel %vm483, %v495, -inf
          %v573 = vmax.f32 %v565, %v569
          %v574 = vmax.f32 %v566, %v570
          %v575 = vmax.f32 %v567, %v571
          %v576 = vmax.f32 %v568, %v572
          %577 = vst.msk [vmem:[#allocation9] sm:$0xff] %vm528, %v573
          %578 = vst.msk [vmem:[#allocation9 + $0x8] sm:$0xff] %vm528, %v574
          %579 = vst.msk [vmem:[#allocation9 + $0x10] sm:$0xff] %vm528, %v575
          %580 = vst.msk [vmem:[#allocation9 + $0x18] sm:$0xff] %vm528, %v576
        $region60: #{tpu_custom_call.1} parent=35 // pred_fallthru
          _
        // Predicated region
        $region61: #{tpu_custom_call.1} parent=35 // pred_check
          %p581 = pneg %p385
        $region62: #{tpu_custom_call.1} parent=35 // pred_check_branch
          %583 = sbr.rel (%p581) target = $region64
        $region63: #{tpu_custom_call.1} parent=35 // pred_region
          %v584 = vld [vmem:[#allocation2] sm:$0xf]
          %vm585 = vcmask 125952
          %v586 = vsel %vm585, %v584, 0.0
          %587 = vadd.xlane.f32.xlu0 %v586
          %v588 = vpop.xlane.xlu0 %587
          %v589 = vrot.slane %v588, 4
          %v590 = vadd.f32 %v588, %v589
          %v591 = vrot.slane %v590, 2
          %v592 = vadd.f32 %v590, %v591
          %v593 = vrot.slane %v592, 1
          %v594 = vadd.f32 %v592, %v593
          %s595 = vtos %v594
          %v596 = vld [vmem:[#allocation3] sm:$0xf]
          %v597 = vsel %vm585, %v596, 0.0
          %598 = vadd.xlane.f32.xlu0 %v597
          %v599 = vpop.xlane.xlu0 %598
          %v600 = vrot.slane %v599, 4
          %v601 = vadd.f32 %v599, %v600
          %v602 = vrot.slane %v601, 2
          %v603 = vadd.f32 %v601, %v602
          %v604 = vrot.slane %v603, 1
          %v605 = vadd.f32 %v603, %v604
          %s606 = vtos %v605
          %s607 = ssub.f32 %s606, %s595
          %v608 = vld [vmem:[#allocation4] sm:$0xf]
          %v609 = vsel %vm585, %v608, 0.0
          %610 = vadd.xlane.f32.xlu0 %v609
          %v611 = vpop.xlane.xlu0 %610
          %v612 = vrot.slane %v611, 4
          %v613 = vadd.f32 %v611, %v612
          %v614 = vrot.slane %v613, 2
          %v615 = vadd.f32 %v613, %v614
          %v616 = vrot.slane %v615, 1
          %v617 = vadd.f32 %v615, %v616
          %s618 = vtos %v617
          %v619 = vld [vmem:[#allocation5] sm:$0xf]
          %v620 = vsel %vm585, %v619, 0.0
          %621 = vadd.xlane.f32.xlu0 %v620
          %v622 = vpop.xlane.xlu0 %621
          %v623 = vrot.slane %v622, 4
          %v624 = vadd.f32 %v622, %v623
          %v625 = vrot.slane %v624, 2
          %v626 = vadd.f32 %v624, %v625
          %v627 = vrot.slane %v626, 1
          %v628 = vadd.f32 %v626, %v627
          %s629 = vtos %v628
          %v630 = vld [vmem:[#allocation6] sm:$0xff]
          %v631 = vld [vmem:[#allocation6 + $0x8] sm:$0xff]
          %v632 = vld [vmem:[#allocation6 + $0x10] sm:$0xff]
          %v633 = vld [vmem:[#allocation6 + $0x18] sm:$0xff]
          %vm634 = vcmask 261120
          %v635 = vsel %vm634, %v630, 0.0
          %v636 = vsel %vm634, %v631, 0.0
          %v637 = vadd.f32 %v635, %v636
          %v638 = vsel %vm634, %v632, 0.0
          %v639 = vadd.f32 %v637, %v638
          %v640 = vsel %vm634, %v633, 0.0
          %v641 = vadd.f32 %v639, %v640
          %642 = vadd.xlane.f32.xlu0 %v641
          %v643 = vpop.xlane.xlu0 %642
          %v644 = vrot.slane %v643, 4
          %v645 = vadd.f32 %v643, %v644
          %v646 = vrot.slane %v645, 2
          %v647 = vadd.f32 %v645, %v646
          %v648 = vrot.slane %v647, 1
          %v649 = vadd.f32 %v647, %v648
          %s650 = vtos %v649
          %v651 = vld [vmem:[#allocation7] sm:$0xff]
          %v652 = vld [vmem:[#allocation7 + $0x8] sm:$0xff]
          %v653 = vld [vmem:[#allocation7 + $0x10] sm:$0xff]
          %v654 = vld [vmem:[#allocation7 + $0x18] sm:$0xff]
          %v655 = vsel %vm634, %v651, 0.0
          %v656 = vsel %vm634, %v652, 0.0
          %v657 = vadd.f32 %v655, %v656
          %v658 = vsel %vm634, %v653, 0.0
          %v659 = vadd.f32 %v657, %v658
          %v660 = vsel %vm634, %v654, 0.0
          %v661 = vadd.f32 %v659, %v660
          %662 = vadd.xlane.f32.xlu0 %v661
          %v663 = vpop.xlane.xlu0 %662
          %v664 = vrot.slane %v663, 4
          %v665 = vadd.f32 %v663, %v664
          %v666 = vrot.slane %v665, 2
          %v667 = vadd.f32 %v665, %v666
          %v668 = vrot.slane %v667, 1
          %v669 = vadd.f32 %v667, %v668
          %s670 = vtos %v669
          %v671 = vld [vmem:[#allocation8] sm:$0xff]
          %v672 = vld [vmem:[#allocation8 + $0x8] sm:$0xff]
          %v673 = vld [vmem:[#allocation8 + $0x10] sm:$0xff]
          %v674 = vld [vmem:[#allocation8 + $0x18] sm:$0xff]
          %v675 = vsel %vm634, %v671, 0.0
          %v676 = vsel %vm634, %v672, 0.0
          %v677 = vadd.f32 %v675, %v676
          %v678 = vsel %vm634, %v673, 0.0
          %v679 = vadd.f32 %v677, %v678
          %v680 = vsel %vm634, %v674, 0.0
          %v681 = vadd.f32 %v679, %v680
          %682 = vadd.xlane.f32.xlu0 %v681
          %v683 = vpop.xlane.xlu0 %682
          %v684 = vrot.slane %v683, 4
          %v685 = vadd.f32 %v683, %v684
          %v686 = vrot.slane %v685, 2
          %v687 = vadd.f32 %v685, %v686
          %v688 = vrot.slane %v687, 1
          %v689 = vadd.f32 %v687, %v688
          %s690 = vtos %v689
          %v691 = vld [vmem:[#allocation9] sm:$0xff]
          %v692 = vld [vmem:[#allocation9 + $0x8] sm:$0xff]
          %v693 = vld [vmem:[#allocation9 + $0x10] sm:$0xff]
          %v694 = vld [vmem:[#allocation9 + $0x18] sm:$0xff]
          %v695 = vsel %vm634, %v691, -inf
          %v696 = vsel %vm634, %v692, -inf
          %v697 = vsel %vm634, %v693, -inf
          %v698 = vsel %vm634, %v694, -inf
          %v699 = vmax.f32 %v695, %v696
          %v700 = vmax.f32 %v697, %v698
          %v701 = vmax.f32 %v699, %v700
          %702 = vmax.xlane.f32.xlu0 %v701
          %v703 = vpop.xlane.xlu0 %702
          %v704 = vrot.slane %v703, 4
          %v705 = vmax.f32 %v703, %v704
          %v706 = vrot.slane %v705, 2
          %v707 = vmax.f32 %v705, %v706
          %v708 = vrot.slane %v707, 1
          %v709 = vmax.f32 %v707, %v708
          %s710 = vtos %v709
          %v711 = vlaneseq
          %v712 = vshrl.u32 %v711, 7
          %vm713 = vcmp.eq.s32.totalorder %v712, 0
          %v714 = vstv %s595
          %v715 = vsel %vm713, %v714, 0.0
          %vm716 = vcmp.eq.s32.totalorder %v712, 1
          %v717 = vstv %s607
          %v718 = vsel %vm716, %v717, %v715
          %vm719 = vcmp.eq.s32.totalorder %v712, 2
          %v720 = vstv %s618
          %v721 = vsel %vm719, %v720, %v718
          %vm722 = vcmp.eq.s32.totalorder %v712, 3
          %v723 = vstv %s629
          %v724 = vsel %vm722, %v723, %v721
          %vm725 = vcmp.eq.s32.totalorder %v712, 4
          %v726 = vstv %s650
          %v727 = vsel %vm725, %v726, %v724
          %vm728 = vcmp.eq.s32.totalorder %v712, 5
          %v729 = vstv %s670
          %v730 = vsel %vm728, %v729, %v727
          %vm731 = vcmp.eq.s32.totalorder %v712, 6
          %v732 = vstv %s690
          %v733 = vsel %vm731, %v732, %v730
          %vm734 = vcmp.eq.s32.totalorder %v712, 7
          %v735 = vstv %s710
          %v736 = vsel %vm734, %v735, %v733
          %737 = vst [vmem:[%s372] sm:$0xff] %v736
        $region64: #{tpu_custom_call.1} parent=35 // pred_fallthru
          _
        %s738 = sand.u32 %s175, 1
        %s739 = scalar_lea.sflag [#allocation12], %s738
        %s740 = sand.u32 %s175, 1
        %s741 = smul.addr %s740, 8
        %s742 = scalar_lea.vmem [#allocation18], %s741
        // Predicated region
        $region65: #{tpu_custom_call.1} parent=35 // pred_check
          %p743 = pneg %p185
        $region66: #{tpu_custom_call.1} parent=35 // pred_check_branch
          %745 = sbr.rel (%p743) target = $region68
        $region67: #{tpu_custom_call.1} parent=35 // pred_region
          %s747 = ssub.s32 128, 128
          %748 = vsyncadd %s739, %s747
          %s749 = smul.addr %s31, 128
          %s750 = scalar_lea.hbm %s4, %s749
          %s752 = sshll.u32 %s742, 4
          %s753 = int_to_ptr.vmem [resolvable:$true] %s752
          %755 = dma.vmem_to_hbm [thread:$0]  %s753, 128, %s750, %s739
        $region68: #{tpu_custom_call.1} parent=35 // pred_fallthru
          _
      $region36: #{tpu_custom_call.1} parent=5 // pred_fallthru
        _
      %p756 = scmp.le.s32.totalorder 2, %s22
      // Predicated region
      $region69: #{tpu_custom_call.1} parent=5 // pred_check
        %p757 = pneg %p756
      $region70: #{tpu_custom_call.1} parent=5 // pred_check_branch
        %759 = sbr.rel (%p757) target = $region72
      $region71: #{tpu_custom_call.1} parent=5 // pred_region
        %s760 = ssub.s32 %s22, 2
        // Predicated region
        $region73: #{tpu_custom_call.1} parent=71 // pred_check
          %p761 = pneg %p191
        $region74: #{tpu_custom_call.1} parent=71 // pred_check_branch
          %763 = sbr.rel (%p761) target = $region76
        $region75: #{tpu_custom_call.1} parent=71 // pred_region
          %s764 = sand.u32 %s176, 1
          %s765 = scalar_lea.sflag [#allocation12], %s764
          %s766 = sand.u32 %s176, 1
          %s767 = smul.addr %s766, 8
          %s768 = scalar_lea.vmem [#allocation18], %s767
          %769 = dma.done %s765, 128
        $region76: #{tpu_custom_call.1} parent=71 // pred_fallthru
          _
      $region72: #{tpu_custom_call.1} parent=5 // pred_fallthru
        _
    $region6: #{tpu_custom_call.1} parent=1 // loop_footer
      %s26 = sadd.s32 1, %s22
    $region7: #{tpu_custom_call.1} parent=1 // loop_footer_branch
      %21 = sbr.rel target = $region3
    $region8: #{tpu_custom_call.1} parent=1 // loop_exit
      _
    %770 = vsyncpa [#allocation11], 1
    %s771 = scalar_lea.sflag [#allocation11], 1
    %772 = vsyncpa %s771, 1
    %773 = vsyncpa [#allocation14], 1
    %s774 = scalar_lea.sflag [#allocation14], 1
    %775 = vsyncpa %s774, 1
    %776 = vsyncpa [#allocation17], 1
    %s777 = scalar_lea.sflag [#allocation17], 1
    %778 = vsyncpa %s777, 1
    %779 = vsyncpa [#allocation12], 1
    %s780 = scalar_lea.sflag [#allocation12], 1
    %781 = vsyncpa %s780, 1

</llo_original>
